<compile_context>
chip_gen: v5e
topology: v5e:2x2
jax: 0.10.0
libtpu: 0.0.40
codegen_flags: <defaults>
</compile_context>

<pallas_src>
import functools

import jax
import jax.numpy as jnp
from jax.experimental import pallas as pl
from jax.experimental.pallas import tpu as pltpu

N_FEATURES = 128   # synthetic small stand-in for effnetv2_l's 1280 classifier in_features
HEAD_H1 = 256
HEAD_H2 = 32
TARGET_SIZE = 1
K_PAD = 128        # im2col K (= in_chans*9 = 81) zero-padded to a full lane
OUT_PAD = 128      # lane-dense padded output width; real output is column 0
TM_CAP = 8192      # spatial-rows tile cap (multiple of 8); ~2 MiB/buffer bf16 at K_PAD=128


# ---------------------------------------------------------------------------
# Single fused kernel: stem conv (im2col matmul) + bias + SiLU + global average
# pool + 3-layer MLP head.
#   grid = (B, HW_tiles); HW axis is a reduction ("arbitrary"), batch is "parallel".
#   Only the tiny (B, 1, OUT_PAD) head output ever hits HBM.
# ---------------------------------------------------------------------------
def _fused_stem_head_kernel(p_ref, w_ref, b_ref, corr_ref,
                            w1_ref, b1_ref, w2_ref, b2_ref, w3_ref, b3_ref,
                            o_ref, acc_ref, *, hw, tm):
    t = pl.program_id(1)

    @pl.when(t == 0)
    def _init():
        acc_ref[...] = jnp.zeros_like(acc_ref)

    x = p_ref[0]                                                      # (TM, K_PAD) bf16
    h = jnp.dot(x, w_ref[...], preferred_element_type=jnp.float32)    # (TM, F) f32 on MXU
    h = h + b_ref[...]
    h = h * jax.nn.sigmoid(h)                                         # SiLU (f32 VPU/EUP)

    # Sublane-grouped partial sum: VALU-only adds per tile; XLU reduce deferred to finalize.
    acc_ref[...] += jnp.sum(h.reshape(tm // 8, 8, h.shape[-1]), axis=0)   # (8, F)

    @pl.when(t == pl.num_programs(1) - 1)
    def _finalize():
        s = jnp.sum(acc_ref[...], axis=0, keepdims=True)              # (1, F), one XLU reduce
        # Padded spatial rows contributed silu(bias) each; subtract the precomputed excess.
        pooled = (s - corr_ref[...]) * jnp.float32(1.0 / hw)          # mean over HW
        h1 = jnp.dot(pooled, w1_ref[...], preferred_element_type=jnp.float32) + b1_ref[...]
        h1 = jnp.where(h1 > 0, h1, 0.01 * h1)                         # LeakyReLU(0.01)
        h2 = jnp.dot(h1, w2_ref[...], preferred_element_type=jnp.float32) + b2_ref[...]
        h2 = jnp.where(h2 > 0, h2, 0.01 * h2)                         # LeakyReLU(0.01)
        o_ref[0] = jnp.dot(h2, w3_ref[...], preferred_element_type=jnp.float32) + b3_ref[...]


def fused_stem_gap_head(patches, w_stem, b_stem, corr,
                        w1, b1, w2, b2, w3p, b3p, *, hw, tm):
    """patches: (B, HW_pad, K_PAD) bf16 -> (B, 1, OUT_PAD) f32 (head output in column 0)."""
    B, hw_pad, K = patches.shape
    F = w_stem.shape[1]
    n_t = hw_pad // tm
    const2 = lambda bi, ti: (0, 0)
    kernel = functools.partial(_fused_stem_head_kernel, hw=hw, tm=tm)
    return pl.pallas_call(
        kernel,
        out_shape=jax.ShapeDtypeStruct((B, 1, OUT_PAD), jnp.float32),
        grid=(B, n_t),
        in_specs=[
            pl.BlockSpec((1, tm, K), lambda bi, ti: (bi, ti, 0)),   # streamed patches
            pl.BlockSpec((K, F), const2),                           # VMEM-resident stem weight
            pl.BlockSpec((1, F), const2),                           # stem bias (f32)
            pl.BlockSpec((1, F), const2),                           # pad-row correction (f32)
            pl.BlockSpec((F, HEAD_H1), const2),                     # head W1
            pl.BlockSpec((1, HEAD_H1), const2),                     # head b1
            pl.BlockSpec((HEAD_H1, HEAD_H2), const2),               # head W2
            pl.BlockSpec((1, HEAD_H2), const2),                     # head b2
            pl.BlockSpec((HEAD_H2, OUT_PAD), const2),               # head W3 (lane-padded)
            pl.BlockSpec((1, OUT_PAD), const2),                     # head b3 (lane-padded)
        ],
        out_specs=pl.BlockSpec((1, 1, OUT_PAD), lambda bi, ti: (bi, 0, 0)),
        scratch_shapes=[pltpu.VMEM((8, F), jnp.float32)],
        compiler_params=pltpu.CompilerParams(
            dimension_semantics=("parallel", "arbitrary"),
            vmem_limit_bytes=32 * 1024 * 1024),
    )(patches, w_stem, b_stem, corr, w1, b1, w2, b2, w3p, b3p)


# ---------------------------------------------------------------------------
# Parameter init (deterministic, synthetic) and full forward
# ---------------------------------------------------------------------------
def init_params(in_chans=9):
    keys = jax.random.split(jax.random.PRNGKey(42), 8)
    k_patch = in_chans * 3 * 3
    scale = lambda fan_in: 1.0 / jnp.sqrt(jnp.float32(fan_in))
    return {
        "w_stem": jax.random.normal(keys[0], (k_patch, N_FEATURES), jnp.float32) * scale(k_patch),
        "b_stem": jax.random.normal(keys[1], (1, N_FEATURES), jnp.float32) * 0.01,
        "w1": jax.random.normal(keys[2], (N_FEATURES, HEAD_H1), jnp.float32) * scale(N_FEATURES),
        "b1": jax.random.normal(keys[3], (1, HEAD_H1), jnp.float32) * 0.01,
        "w2": jax.random.normal(keys[4], (HEAD_H1, HEAD_H2), jnp.float32) * scale(HEAD_H1),
        "b2": jax.random.normal(keys[5], (1, HEAD_H2), jnp.float32) * 0.01,
        "w3": jax.random.normal(keys[6], (HEAD_H2, TARGET_SIZE), jnp.float32) * scale(HEAD_H2),
        "b3": jax.random.normal(keys[7], (1, TARGET_SIZE), jnp.float32) * 0.01,
    }


@jax.jit
def cod_model_forward(x_nchw, params):
    """x_nchw: (B, in_chans, H, W) float32 -> (B, 1) float32."""
    B, C, H, W = x_nchw.shape
    K = C * 9

    # Cast to bf16 BEFORE the patch extraction so every wrapper pass moves 2 bytes/elem.
    # (Patch extraction is pure data rearrangement -> bf16 cast before/after is identical.)
    x_bf16 = x_nchw.astype(jnp.bfloat16)

    # im2col with channel-last output requested directly (no separate transpose pass):
    # (B, Ho, Wo, C*9), channel-major patch features.
    patches = jax.lax.conv_general_dilated_patches(
        x_bf16, filter_shape=(3, 3), window_strides=(2, 2),
        padding=((1, 1), (1, 1)),
        dimension_numbers=("NCHW", "OIHW", "NHWC"))
    Ho, Wo = patches.shape[1], patches.shape[2]
    HW = Ho * Wo
    patches = patches.reshape(B, HW, K)                       # metadata-only reshape

    # Spatial tile: as large as possible (multiple of 8), capped for VMEM headroom.
    TM = min(TM_CAP, max(8, ((HW + 7) // 8) * 8))
    HW_pad = ((HW + TM - 1) // TM) * TM

    # One fused bf16 pad: HW -> HW_pad and K (=C*9=81) -> 128 (lane-dense DMA / full MXU K).
    patches = jnp.pad(patches, ((0, 0), (0, HW_pad - HW), (0, K_PAD - K)))

    w_stem = jnp.pad(params["w_stem"], ((0, K_PAD - K), (0, 0))).astype(jnp.bfloat16)
    b_stem = params["b_stem"]
    # Zero-padded spatial rows contribute silu(bias) each to the pooled sum; precompute
    # the excess once here and subtract it in the kernel's finalize (no per-tile mask).
    corr = jnp.float32(HW_pad - HW) * (b_stem * jax.nn.sigmoid(b_stem))

    # Lane-dense last head layer / output (slice the real column outside the kernel).
    w3p = jnp.pad(params["w3"], ((0, 0), (0, OUT_PAD - TARGET_SIZE)))
    b3p = jnp.pad(params["b3"], ((0, 0), (0, OUT_PAD - TARGET_SIZE)))

    out = fused_stem_gap_head(patches, w_stem, b_stem, corr,
                              params["w1"], params["b1"],
                              params["w2"], params["b2"],
                              w3p, b3p, hw=HW, tm=TM)
    return out[:, 0, :TARGET_SIZE]


if __name__ == "__main__":
    key = jax.random.PRNGKey(0)
    # small shapes consistent with the module: batch=2, in_chans=9, spatial=16
    x = jax.random.normal(key, (2, 9, 16, 16), dtype=jnp.float32)
    params = init_params(in_chans=9)

    out = cod_model_forward(x, params)
    out = jax.block_until_ready(out)

    assert out.shape == (2, 1), out.shape
    assert out.dtype == jnp.float32
    assert bool(jnp.all(jnp.isfinite(out)))
    print("KERNEL_OK")
</pallas_src>

<mosaic_0001>
module attributes {stable_mosaic.version = 11 : i64} {
  func.func @_fused_stem_head_kernel(%arg0: i32, %arg1: i32, %arg2: memref<1x64x128xbf16, #tpu.memory_space<vmem>>, %arg3: memref<128x128xbf16, #tpu.memory_space<vmem>>, %arg4: memref<1x128xf32, #tpu.memory_space<vmem>>, %arg5: memref<1x128xf32, #tpu.memory_space<vmem>>, %arg6: memref<128x256xf32, #tpu.memory_space<vmem>>, %arg7: memref<1x256xf32, #tpu.memory_space<vmem>>, %arg8: memref<256x32xf32, #tpu.memory_space<vmem>>, %arg9: memref<1x32xf32, #tpu.memory_space<vmem>>, %arg10: memref<32x128xf32, #tpu.memory_space<vmem>>, %arg11: memref<1x128xf32, #tpu.memory_space<vmem>>, %arg12: memref<1x1x128xf32, #tpu.memory_space<vmem>>, %arg13: memref<8x128xf32, #tpu.memory_space<vmem>>) attributes {dimension_semantics = [#tpu.dimension_semantics<parallel>, #tpu.dimension_semantics<arbitrary>], iteration_bounds = array<i64: 2, 1>, scalar_prefetch = 0 : i64, scratch_operands = 1 : i64, tpu.core_type = #tpu.core_type<tc>, window_params = [{transform_indices = @transform_0, window_bounds = array<i64: 1, 64, 128>}, {pipeline_mode = #tpu.pipeline_mode<synchronous>, transform_indices = @transform_1, window_bounds = array<i64: 128, 128>}, {pipeline_mode = #tpu.pipeline_mode<synchronous>, transform_indices = @transform_2, window_bounds = array<i64: 1, 128>}, {pipeline_mode = #tpu.pipeline_mode<synchronous>, transform_indices = @transform_3, window_bounds = array<i64: 1, 128>}, {pipeline_mode = #tpu.pipeline_mode<synchronous>, transform_indices = @transform_4, window_bounds = array<i64: 128, 256>}, {pipeline_mode = #tpu.pipeline_mode<synchronous>, transform_indices = @transform_5, window_bounds = array<i64: 1, 256>}, {pipeline_mode = #tpu.pipeline_mode<synchronous>, transform_indices = @transform_6, window_bounds = array<i64: 256, 32>}, {pipeline_mode = #tpu.pipeline_mode<synchronous>, transform_indices = @transform_7, window_bounds = array<i64: 1, 32>}, {pipeline_mode = #tpu.pipeline_mode<synchronous>, transform_indices = @transform_8, window_bounds = array<i64: 32, 128>}, {pipeline_mode = #tpu.pipeline_mode<synchronous>, transform_indices = @transform_9, window_bounds = array<i64: 1, 128>}, {transform_indices = @transform_10, window_bounds = array<i64: 1, 1, 128>}]} {
    %c0_i32 = arith.constant 0 : i32
    %0 = arith.cmpi eq, %arg1, %c0_i32 : i32
    %1 = arith.extui %0 : i1 to i32
    %c0_i32_0 = arith.constant 0 : i32
    %2 = arith.cmpi ne, %1, %c0_i32_0 : i32
    scf.if %2 {
      %cst_15 = arith.constant 0.000000e+00 : f32
      %24 = vector.broadcast %cst_15 : f32 to vector<8x128xf32>
      %c0_16 = arith.constant 0 : index
      %c0_17 = arith.constant 0 : index
      %25 = vector.load %arg13[%c0_16, %c0_17] : memref<8x128xf32, #tpu.memory_space<vmem>>, vector<8x128xf32>
      tpu.vector_store %arg13[%c0_16, %c0_17], %24 {strides = array<i32>} : memref<8x128xf32, #tpu.memory_space<vmem>>, vector<8x128xf32>,
    } else {
    }
    %c0 = arith.constant 0 : index
    %c0_1 = arith.constant 0 : index
    %c0_2 = arith.constant 0 : index
    %3 = vector.load %arg2[%c0, %c0_1, %c0_2] : memref<1x64x128xbf16, #tpu.memory_space<vmem>>, vector<1x64x128xbf16>
    %4 = vector.shape_cast %3 : vector<1x64x128xbf16> to vector<64x128xbf16>
    %c0_3 = arith.constant 0 : index
    %c0_4 = arith.constant 0 : index
    %5 = vector.load %arg3[%c0_3, %c0_4] : memref<128x128xbf16, #tpu.memory_space<vmem>>, vector<128x128xbf16>
    %cst = arith.constant dense<0.000000e+00> : vector<64x128xf32>
    %6 = tpu.matmul %4, %5, %cst {dimension_numbers = #tpu.dot_dimension_numbers<[1], [0], [0], [1], [0, 0, 1, 1], [], []>} : vector<64x128xbf16>, vector<128x128xbf16>, vector<64x128xf32> -> vector<64x128xf32>
    %c0_5 = arith.constant 0 : index
    %c0_6 = arith.constant 0 : index
    %7 = vector.load %arg4[%c0_5, %c0_6] : memref<1x128xf32, #tpu.memory_space<vmem>>, vector<1x128xf32>
    %8 = vector.broadcast %7 : vector<1x128xf32> to vector<64x128xf32>
    %9 = arith.addf %6, %8 : vector<64x128xf32>
    %10 = arith.negf %9 : vector<64x128xf32>
    %11 = math.exp %10 : vector<64x128xf32>
    %cst_7 = arith.constant 1.000000e+00 : f32
    %12 = vector.broadcast %cst_7 : f32 to vector<64x128xf32>
    %13 = arith.addf %12, %11 : vector<64x128xf32>
    %14 = arith.divf %12, %13 : vector<64x128xf32>
    %15 = arith.mulf %9, %14 : vector<64x128xf32>
    %c0_8 = arith.constant 0 : index
    %c0_9 = arith.constant 0 : index
    %16 = vector.load %arg13[%c0_8, %c0_9] : memref<8x128xf32, #tpu.memory_space<vmem>>, vector<8x128xf32>
    %17 = vector.shape_cast %15 : vector<64x128xf32> to vector<8x8x128xf32>
    %cst_10 = arith.constant dense<0.000000e+00> : vector<8x128xf32>
    %18 = vector.multi_reduction <add>, %17, %cst_10 [0] : vector<8x8x128xf32> to vector<8x128xf32>
    %19 = arith.addf %16, %18 : vector<8x128xf32>
    %c0_11 = arith.constant 0 : index
    %c0_12 = arith.constant 0 : index
    %20 = vector.load %arg13[%c0_11, %c0_12] : memref<8x128xf32, #tpu.memory_space<vmem>>, vector<8x128xf32>
    tpu.vector_store %arg13[%c0_11, %c0_12], %19 {strides = array<i32>} : memref<8x128xf32, #tpu.memory_space<vmem>>, vector<8x128xf32>,
    %c0_i32_13 = arith.constant 0 : i32
    %21 = arith.cmpi eq, %arg1, %c0_i32_13 : i32
    %22 = arith.extui %21 : i1 to i32
    %c0_i32_14 = arith.constant 0 : i32
    %23 = arith.cmpi ne, %22, %c0_i32_14 : i32
    scf.if %23 {
      %c0_15 = arith.constant 0 : index
      %c0_16 = arith.constant 0 : index
      %24 = vector.load %arg13[%c0_15, %c0_16] : memref<8x128xf32, #tpu.memory_space<vmem>>, vector<8x128xf32>
      %cst_17 = arith.constant dense<0.000000e+00> : vector<128xf32>
      %25 = vector.multi_reduction <add>, %24, %cst_17 [0] : vector<8x128xf32> to vector<128xf32>
      %26 = vector.shape_cast %25 : vector<128xf32> to vector<1x128xf32>
      %c0_18 = arith.constant 0 : index
      %c0_19 = arith.constant 0 : index
      %27 = vector.load %arg5[%c0_18, %c0_19] : memref<1x128xf32, #tpu.memory_space<vmem>>, vector<1x128xf32>
      %28 = arith.subf %26, %27 : vector<1x128xf32>
      %cst_20 = arith.constant 1.562500e-02 : f32
      %29 = vector.broadcast %cst_20 : f32 to vector<1x128xf32>
      %30 = arith.mulf %28, %29 : vector<1x128xf32>
      %c0_21 = arith.constant 0 : index
      %c0_22 = arith.constant 0 : index
      %31 = vector.load %arg6[%c0_21, %c0_22] : memref<128x256xf32, #tpu.memory_space<vmem>>, vector<128x256xf32>
      %cst_23 = arith.constant dense<0.000000e+00> : vector<1x256xf32>
      %32 = tpu.matmul %30, %31, %cst_23 {dimension_numbers = #tpu.dot_dimension_numbers<[1], [0], [0], [1], [0, 0, 1, 1], [], []>} : vector<1x128xf32>, vector<128x256xf32>, vector<1x256xf32> -> vector<1x256xf32>
      %c0_24 = arith.constant 0 : index
      %c0_25 = arith.constant 0 : index
      %33 = vector.load %arg7[%c0_24, %c0_25] : memref<1x256xf32, #tpu.memory_space<vmem>>, vector<1x256xf32>
      %34 = arith.addf %32, %33 : vector<1x256xf32>
      %cst_26 = arith.constant 0.000000e+00 : f32
      %35 = vector.broadcast %cst_26 : f32 to vector<1x256xf32>
      %36 = arith.cmpf ogt, %34, %35 : vector<1x256xf32>
      %cst_27 = arith.constant 0.00999999977 : f32
      %37 = vector.broadcast %cst_27 : f32 to vector<1x256xf32>
      %38 = arith.mulf %37, %34 : vector<1x256xf32>
      %39 = arith.select %36, %34, %38 : vector<1x256xi1>, vector<1x256xf32>
      %c0_28 = arith.constant 0 : index
      %c0_29 = arith.constant 0 : index
      %40 = vector.load %arg8[%c0_28, %c0_29] : memref<256x32xf32, #tpu.memory_space<vmem>>, vector<256x32xf32>
      %cst_30 = arith.constant dense<0.000000e+00> : vector<1x32xf32>
      %41 = tpu.matmul %39, %40, %cst_30 {dimension_numbers = #tpu.dot_dimension_numbers<[1], [0], [0], [1], [0, 0, 1, 1], [], []>} : vector<1x256xf32>, vector<256x32xf32>, vector<1x32xf32> -> vector<1x32xf32>
      %c0_31 = arith.constant 0 : index
      %c0_32 = arith.constant 0 : index
      %42 = vector.load %arg9[%c0_31, %c0_32] : memref<1x32xf32, #tpu.memory_space<vmem>>, vector<1x32xf32>
      %43 = arith.addf %41, %42 : vector<1x32xf32>
      %cst_33 = arith.constant 0.000000e+00 : f32
      %44 = vector.broadcast %cst_33 : f32 to vector<1x32xf32>
      %45 = arith.cmpf ogt, %43, %44 : vector<1x32xf32>
      %cst_34 = arith.constant 0.00999999977 : f32
      %46 = vector.broadcast %cst_34 : f32 to vector<1x32xf32>
      %47 = arith.mulf %46, %43 : vector<1x32xf32>
      %48 = arith.select %45, %43, %47 : vector<1x32xi1>, vector<1x32xf32>
      %c0_35 = arith.constant 0 : index
      %c0_36 = arith.constant 0 : index
      %49 = vector.load %arg10[%c0_35, %c0_36] : memref<32x128xf32, #tpu.memory_space<vmem>>, vector<32x128xf32>
      %cst_37 = arith.constant dense<0.000000e+00> : vector<1x128xf32>
      %50 = tpu.matmul %48, %49, %cst_37 {dimension_numbers = #tpu.dot_dimension_numbers<[1], [0], [0], [1], [0, 0, 1, 1], [], []>} : vector<1x32xf32>, vector<32x128xf32>, vector<1x128xf32> -> vector<1x128xf32>
      %c0_38 = arith.constant 0 : index
      %c0_39 = arith.constant 0 : index
      %51 = vector.load %arg11[%c0_38, %c0_39] : memref<1x128xf32, #tpu.memory_space<vmem>>, vector<1x128xf32>
      %52 = arith.addf %50, %51 : vector<1x128xf32>
      %c0_40 = arith.constant 0 : index
      %c0_41 = arith.constant 0 : index
      %c0_42 = arith.constant 0 : index
      %53 = vector.load %arg12[%c0_40, %c0_41, %c0_42] : memref<1x1x128xf32, #tpu.memory_space<vmem>>, vector<1x1x128xf32>
      %54 = vector.shape_cast %53 : vector<1x1x128xf32> to vector<1x128xf32>
      %55 = vector.shape_cast %52 : vector<1x128xf32> to vector<1x1x128xf32>
      tpu.vector_store %arg12[%c0_40, %c0_41, %c0_42], %55 {strides = array<i32>} : memref<1x1x128xf32, #tpu.memory_space<vmem>>, vector<1x1x128xf32>,
    } else {
    }
    return
  }
  func.func @transform_0(%arg0: i32, %arg1: i32) -> (i32, i32, i32) {
    %c0_i32 = arith.constant 0 : i32
    %c0_i32_0 = arith.constant 0 : i32
    return %arg0, %arg1, %c0_i32 : i32, i32, i32
  }
  func.func @transform_1(%arg0: i32, %arg1: i32) -> (i32, i32) {
    %c0_i32 = arith.constant 0 : i32
    %c0_i32_0 = arith.constant 0 : i32
    %c0_i32_1 = arith.constant 0 : i32
    return %c0_i32, %c0_i32_0 : i32, i32
  }
  func.func @transform_2(%arg0: i32, %arg1: i32) -> (i32, i32) {
    %c0_i32 = arith.constant 0 : i32
    %c0_i32_0 = arith.constant 0 : i32
    %c0_i32_1 = arith.constant 0 : i32
    return %c0_i32, %c0_i32_0 : i32, i32
  }
  func.func @transform_3(%arg0: i32, %arg1: i32) -> (i32, i32) {
    %c0_i32 = arith.constant 0 : i32
    %c0_i32_0 = arith.constant 0 : i32
    %c0_i32_1 = arith.constant 0 : i32
    return %c0_i32, %c0_i32_0 : i32, i32
  }
  func.func @transform_4(%arg0: i32, %arg1: i32) -> (i32, i32) {
    %c0_i32 = arith.constant 0 : i32
    %c0_i32_0 = arith.constant 0 : i32
    %c0_i32_1 = arith.constant 0 : i32
    return %c0_i32, %c0_i32_0 : i32, i32
  }
  func.func @transform_5(%arg0: i32, %arg1: i32) -> (i32, i32) {
    %c0_i32 = arith.constant 0 : i32
    %c0_i32_0 = arith.constant 0 : i32
    %c0_i32_1 = arith.constant 0 : i32
    return %c0_i32, %c0_i32_0 : i32, i32
  }
  func.func @transform_6(%arg0: i32, %arg1: i32) -> (i32, i32) {
    %c0_i32 = arith.constant 0 : i32
    %c0_i32_0 = arith.constant 0 : i32
    %c0_i32_1 = arith.constant 0 : i32
    return %c0_i32, %c0_i32_0 : i32, i32
  }
  func.func @transform_7(%arg0: i32, %arg1: i32) -> (i32, i32) {
    %c0_i32 = arith.constant 0 : i32
    %c0_i32_0 = arith.constant 0 : i32
    %c0_i32_1 = arith.constant 0 : i32
    return %c0_i32, %c0_i32_0 : i32, i32
  }
  func.func @transform_8(%arg0: i32, %arg1: i32) -> (i32, i32) {
    %c0_i32 = arith.constant 0 : i32
    %c0_i32_0 = arith.constant 0 : i32
    %c0_i32_1 = arith.constant 0 : i32
    return %c0_i32, %c0_i32_0 : i32, i32
  }
  func.func @transform_9(%arg0: i32, %arg1: i32) -> (i32, i32) {
    %c0_i32 = arith.constant 0 : i32
    %c0_i32_0 = arith.constant 0 : i32
    %c0_i32_1 = arith.constant 0 : i32
    return %c0_i32, %c0_i32_0 : i32, i32
  }
  func.func @transform_10(%arg0: i32, %arg1: i32) -> (i32, i32, i32) {
    %c0_i32 = arith.constant 0 : i32
    %c0_i32_0 = arith.constant 0 : i32
    %c0_i32_1 = arith.constant 0 : i32
    return %arg0, %c0_i32, %c0_i32_0 : i32, i32, i32
  }
}

</mosaic_0001>

<llo_original>
// kernel: cod_model_forward.1
$region0: #{cod_model_forward.1}
  #allocation0 [shape = 'u32[]', space=smem, size = 0x4, offset = 0x4, fixed_abs, tag = 'smem constant byte address 0x4 - core index']
  #allocation1 [shape = 'u32[72,128]{1,0:T(1,128)}', space=vmem, size = 0x9000, scoped, tag = 'internal scratch']
  #allocation2 [shape = 'f32[8,128]{1,0:T(8,128)}', space=vmem, size = 0x1000, scoped, tag = 'scratch operand']
  %s0 = inlined_call_operand.vmem [shape: bf16[2,64,128], index: 0, kind: input, shape index: {}]
  %s1 = inlined_call_operand.vmem [shape: bf16[128,128], index: 1, kind: input, shape index: {}]
  %s2 = inlined_call_operand.vmem [shape: f32[1,128], index: 2, kind: input, shape index: {}]
  %s3 = inlined_call_operand.vmem [shape: f32[1,128], index: 3, kind: input, shape index: {}]
  %s4 = inlined_call_operand.vmem [shape: f32[128,256], index: 4, kind: input, shape index: {}]
  %s5 = inlined_call_operand.vmem [shape: f32[1,256], index: 5, kind: input, shape index: {}]
  %s6 = inlined_call_operand.vmem [shape: f32[256,32], index: 6, kind: input, shape index: {}]
  %s7 = inlined_call_operand.vmem [shape: f32[1,32], index: 7, kind: input, shape index: {}]
  %s8 = inlined_call_operand.vmem [shape: f32[32,128], index: 8, kind: input, shape index: {}]
  %s9 = inlined_call_operand.vmem [shape: f32[1,128], index: 9, kind: input, shape index: {}]
  %s10 = inlined_call_operand.vmem [shape: f32[2,1,128], index: 10, kind: output, shape index: {}]
  %s11 = sld [smem:[#allocation0]]
  $region81: #{cod_model_forward.1} parent=0
    _
  %s13 = ssub.s32 1, %s11
  %s14 = scalar_select 0, %s13, %s11
  loop: start=0, step=1, limit=4
  $region2: #{cod_model_forward.1} parent=0 // loop_pre_header
    _
  $region3: #{cod_model_forward.1} parent=0 // loop_header
    %s16 = sphi 0, %s20
    %p17 = scmp.ge.s32.totalorder %s16, 4
    %s23 = sphi 0, %s35
    %s24 = sphi 0, %s31
    %s25 = sphi 0, %s23
    %s26 = sphi 0, %s24
    %s27 = sphi 0, %s25
    %s28 = sphi 0, %s26
    %s40 = sphi 0, %s42
    %s43 = sphi 0, %s40
    %s44 = sphi 0, %s43
    %s60 = sphi 0, %s44
    %s64 = sphi 0, %s64
    %s66 = sphi 0, %s64
    %s67 = sphi 0, %s66
    %s81 = sphi 0, %s67
    %s85 = sphi 0, %s85
    %s87 = sphi 0, %s85
    %s88 = sphi 0, %s87
    %s102 = sphi 0, %s88
    %s106 = sphi 0, %s106
    %s108 = sphi 0, %s106
    %s109 = sphi 0, %s108
    %s123 = sphi 0, %s109
    %s127 = sphi 0, %s127
    %s129 = sphi 0, %s127
    %s130 = sphi 0, %s129
    %s144 = sphi 0, %s130
    %s148 = sphi 0, %s148
    %s150 = sphi 0, %s148
    %s151 = sphi 0, %s150
    %s165 = sphi 0, %s151
    %s169 = sphi 0, %s169
    %s171 = sphi 0, %s169
    %s172 = sphi 0, %s171
    %s186 = sphi 0, %s172
    %s190 = sphi 0, %s190
    %s192 = sphi 0, %s190
    %s193 = sphi 0, %s192
    %s207 = sphi 0, %s193
    %s211 = sphi 0, %s211
    %s213 = sphi 0, %s211
    %s214 = sphi 0, %s213
    %s228 = sphi 0, %s214
    %s232 = sphi 0, %s232
    %s234 = sphi 0, %s232
    %s235 = sphi 0, %s234
    %s249 = sphi 0, %s235
    %s255 = sphi 0, %s257
    %s258 = sphi 0, %s255
    %s259 = sphi 0, %s258
    %s275 = sphi 0, %s259
  $region4: #{cod_model_forward.1} parent=0 // loop_header_branch
    %19 = sbr.rel (%p17) target = $region8
  $region5: #{cod_model_forward.1} parent=0 // loop_body
    %s21 = ssub.s32 %s16, 1
    %s22 = ssub.s32 %s16, 2
    %s29 = sadd.s32 1, %s24
    %p30 = scmp.ge.s32.totalorder %s29, 1
    %s31 = scalar_select %p30, 0, %s29
    %s32 = sadd.s32 1, %s23
    %s33 = scalar_select %p30, %s32, %s23
    %p34 = scmp.ge.s32.totalorder %s33, 2
    %s35 = scalar_select %p34, 0, %s33
    %s36 = ssub.s32 %s23, %s35
    %s37 = ssub.s32 %s24, %s31
    %s38 = sor.u32 %s36, %s37
    %p39 = scmp.eq.s32.totalorder %s38, 0
    %s41 = sadd.s32 %s40, 1
    %s42 = scalar_select %p39, %s40, %s41
    %p45 = pneg %p39
    %p46 = scmp.eq.s32.totalorder %s16, 1
    %p47 = por %p45, %p46
    %p48 = scmp.ne.s32.totalorder %s40, %s43
    %p49 = scmp.eq.s32.totalorder %s16, 0
    %p50 = por %p48, %p49
    %p51 = scmp.ne.s32.totalorder %s40, %s43
    %p52 = scmp.eq.s32.totalorder %s21, 1
    %p53 = por %p51, %p52
    %p54 = scmp.ne.s32.totalorder %s43, %s44
    %p55 = scmp.eq.s32.totalorder %s21, 0
    %p56 = por %p54, %p55
    %p57 = scmp.ne.s32.totalorder %s43, %s44
    %p58 = scmp.eq.s32.totalorder %s22, 1
    %p59 = por %p57, %p58
    %p61 = scmp.ne.s32.totalorder %s44, %s60
    %p62 = scmp.eq.s32.totalorder %s22, 0
    %p63 = por %p61, %p62
    %s65 = sadd.s32 %s64, 1
    %p68 = scmp.eq.s32.totalorder %s16, 1
    %p69 = scmp.ne.s32.totalorder %s64, %s66
    %p70 = scmp.eq.s32.totalorder %s16, 0
    %p71 = por %p69, %p70
    %p72 = scmp.ne.s32.totalorder %s64, %s66
    %p73 = scmp.eq.s32.totalorder %s21, 1
    %p74 = por %p72, %p73
    %p75 = scmp.ne.s32.totalorder %s66, %s67
    %p76 = scmp.eq.s32.totalorder %s21, 0
    %p77 = por %p75, %p76
    %p78 = scmp.ne.s32.totalorder %s66, %s67
    %p79 = scmp.eq.s32.totalorder %s22, 1
    %p80 = por %p78, %p79
    %p82 = scmp.ne.s32.totalorder %s67, %s81
    %p83 = scmp.eq.s32.totalorder %s22, 0
    %p84 = por %p82, %p83
    %s86 = sadd.s32 %s85, 1
    %p89 = scmp.eq.s32.totalorder %s16, 1
    %p90 = scmp.ne.s32.totalorder %s85, %s87
    %p91 = scmp.eq.s32.totalorder %s16, 0
    %p92 = por %p90, %p91
    %p93 = scmp.ne.s32.totalorder %s85, %s87
    %p94 = scmp.eq.s32.totalorder %s21, 1
    %p95 = por %p93, %p94
    %p96 = scmp.ne.s32.totalorder %s87, %s88
    %p97 = scmp.eq.s32.totalorder %s21, 0
    %p98 = por %p96, %p97
    %p99 = scmp.ne.s32.totalorder %s87, %s88
    %p100 = scmp.eq.s32.totalorder %s22, 1
    %p101 = por %p99, %p100
    %p103 = scmp.ne.s32.totalorder %s88, %s102
    %p104 = scmp.eq.s32.totalorder %s22, 0
    %p105 = por %p103, %p104
    %s107 = sadd.s32 %s106, 1
    %p110 = scmp.eq.s32.totalorder %s16, 1
    %p111 = scmp.ne.s32.totalorder %s106, %s108
    %p112 = scmp.eq.s32.totalorder %s16, 0
    %p113 = por %p111, %p112
    %p114 = scmp.ne.s32.totalorder %s106, %s108
    %p115 = scmp.eq.s32.totalorder %s21, 1
    %p116 = por %p114, %p115
    %p117 = scmp.ne.s32.totalorder %s108, %s109
    %p118 = scmp.eq.s32.totalorder %s21, 0
    %p119 = por %p117, %p118
    %p120 = scmp.ne.s32.totalorder %s108, %s109
    %p121 = scmp.eq.s32.totalorder %s22, 1
    %p122 = por %p120, %p121
    %p124 = scmp.ne.s32.totalorder %s109, %s123
    %p125 = scmp.eq.s32.totalorder %s22, 0
    %p126 = por %p124, %p125
    %s128 = sadd.s32 %s127, 1
    %p131 = scmp.eq.s32.totalorder %s16, 1
    %p132 = scmp.ne.s32.totalorder %s127, %s129
    %p133 = scmp.eq.s32.totalorder %s16, 0
    %p134 = por %p132, %p133
    %p135 = scmp.ne.s32.totalorder %s127, %s129
    %p136 = scmp.eq.s32.totalorder %s21, 1
    %p137 = por %p135, %p136
    %p138 = scmp.ne.s32.totalorder %s129, %s130
    %p139 = scmp.eq.s32.totalorder %s21, 0
    %p140 = por %p138, %p139
    %p141 = scmp.ne.s32.totalorder %s129, %s130
    %p142 = scmp.eq.s32.totalorder %s22, 1
    %p143 = por %p141, %p142
    %p145 = scmp.ne.s32.totalorder %s130, %s144
    %p146 = scmp.eq.s32.totalorder %s22, 0
    %p147 = por %p145, %p146
    %s149 = sadd.s32 %s148, 1
    %p152 = scmp.eq.s32.totalorder %s16, 1
    %p153 = scmp.ne.s32.totalorder %s148, %s150
    %p154 = scmp.eq.s32.totalorder %s16, 0
    %p155 = por %p153, %p154
    %p156 = scmp.ne.s32.totalorder %s148, %s150
    %p157 = scmp.eq.s32.totalorder %s21, 1
    %p158 = por %p156, %p157
    %p159 = scmp.ne.s32.totalorder %s150, %s151
    %p160 = scmp.eq.s32.totalorder %s21, 0
    %p161 = por %p159, %p160
    %p162 = scmp.ne.s32.totalorder %s150, %s151
    %p163 = scmp.eq.s32.totalorder %s22, 1
    %p164 = por %p162, %p163
    %p166 = scmp.ne.s32.totalorder %s151, %s165
    %p167 = scmp.eq.s32.totalorder %s22, 0
    %p168 = por %p166, %p167
    %s170 = sadd.s32 %s169, 1
    %p173 = scmp.eq.s32.totalorder %s16, 1
    %p174 = scmp.ne.s32.totalorder %s169, %s171
    %p175 = scmp.eq.s32.totalorder %s16, 0
    %p176 = por %p174, %p175
    %p177 = scmp.ne.s32.totalorder %s169, %s171
    %p178 = scmp.eq.s32.totalorder %s21, 1
    %p179 = por %p177, %p178
    %p180 = scmp.ne.s32.totalorder %s171, %s172
    %p181 = scmp.eq.s32.totalorder %s21, 0
    %p182 = por %p180, %p181
    %p183 = scmp.ne.s32.totalorder %s171, %s172
    %p184 = scmp.eq.s32.totalorder %s22, 1
    %p185 = por %p183, %p184
    %p187 = scmp.ne.s32.totalorder %s172, %s186
    %p188 = scmp.eq.s32.totalorder %s22, 0
    %p189 = por %p187, %p188
    %s191 = sadd.s32 %s190, 1
    %p194 = scmp.eq.s32.totalorder %s16, 1
    %p195 = scmp.ne.s32.totalorder %s190, %s192
    %p196 = scmp.eq.s32.totalorder %s16, 0
    %p197 = por %p195, %p196
    %p198 = scmp.ne.s32.totalorder %s190, %s192
    %p199 = scmp.eq.s32.totalorder %s21, 1
    %p200 = por %p198, %p199
    %p201 = scmp.ne.s32.totalorder %s192, %s193
    %p202 = scmp.eq.s32.totalorder %s21, 0
    %p203 = por %p201, %p202
    %p204 = scmp.ne.s32.totalorder %s192, %s193
    %p205 = scmp.eq.s32.totalorder %s22, 1
    %p206 = por %p204, %p205
    %p208 = scmp.ne.s32.totalorder %s193, %s207
    %p209 = scmp.eq.s32.totalorder %s22, 0
    %p210 = por %p208, %p209
    %s212 = sadd.s32 %s211, 1
    %p215 = scmp.eq.s32.totalorder %s16, 1
    %p216 = scmp.ne.s32.totalorder %s211, %s213
    %p217 = scmp.eq.s32.totalorder %s16, 0
    %p218 = por %p216, %p217
    %p219 = scmp.ne.s32.totalorder %s211, %s213
    %p220 = scmp.eq.s32.totalorder %s21, 1
    %p221 = por %p219, %p220
    %p222 = scmp.ne.s32.totalorder %s213, %s214
    %p223 = scmp.eq.s32.totalorder %s21, 0
    %p224 = por %p222, %p223
    %p225 = scmp.ne.s32.totalorder %s213, %s214
    %p226 = scmp.eq.s32.totalorder %s22, 1
    %p227 = por %p225, %p226
    %p229 = scmp.ne.s32.totalorder %s214, %s228
    %p230 = scmp.eq.s32.totalorder %s22, 0
    %p231 = por %p229, %p230
    %s233 = sadd.s32 %s232, 1
    %p236 = scmp.eq.s32.totalorder %s16, 1
    %p237 = scmp.ne.s32.totalorder %s232, %s234
    %p238 = scmp.eq.s32.totalorder %s16, 0
    %p239 = por %p237, %p238
    %p240 = scmp.ne.s32.totalorder %s232, %s234
    %p241 = scmp.eq.s32.totalorder %s21, 1
    %p242 = por %p240, %p241
    %p243 = scmp.ne.s32.totalorder %s234, %s235
    %p244 = scmp.eq.s32.totalorder %s21, 0
    %p245 = por %p243, %p244
    %p246 = scmp.ne.s32.totalorder %s234, %s235
    %p247 = scmp.eq.s32.totalorder %s22, 1
    %p248 = por %p246, %p247
    %p250 = scmp.ne.s32.totalorder %s235, %s249
    %p251 = scmp.eq.s32.totalorder %s22, 0
    %p252 = por %p250, %p251
    %s253 = ssub.s32 %s23, %s35
    %p254 = scmp.eq.s32.totalorder %s253, 0
    %s256 = sadd.s32 %s255, 1
    %s257 = scalar_select %p254, %s255, %s256
    %p260 = pneg %p254
    %p261 = scmp.eq.s32.totalorder %s16, 1
    %p262 = por %p260, %p261
    %p263 = scmp.ne.s32.totalorder %s255, %s258
    %p264 = scmp.eq.s32.totalorder %s16, 0
    %p265 = por %p263, %p264
    %p266 = scmp.ne.s32.totalorder %s255, %s258
    %p267 = scmp.eq.s32.totalorder %s21, 1
    %p268 = por %p266, %p267
    %p269 = scmp.ne.s32.totalorder %s258, %s259
    %p270 = scmp.eq.s32.totalorder %s21, 0
    %p271 = por %p269, %p270
    %p272 = scmp.ne.s32.totalorder %s258, %s259
    %p273 = scmp.eq.s32.totalorder %s22, 1
    %p274 = por %p272, %p273
    %p276 = scmp.ne.s32.totalorder %s259, %s275
    %p277 = scmp.eq.s32.totalorder %s22, 0
    %p278 = por %p276, %p277
    %p279 = scmp.le.s32.totalorder 1, %s16
    %p280 = scmp.lt.s32.totalorder %s16, 3
    %p281 = pnand %p279, %p280
    %p282 = pneg %p281
    // Predicated region
    $region9: #{cod_model_forward.1} parent=5 // pred_check
      _
    $region10: #{cod_model_forward.1} parent=5 // pred_check_branch
      %284 = sbr.rel (%p281) target = $region12
    $region11: #{cod_model_forward.1} parent=5 // pred_region
      %s285 = ssub.s32 %s16, 1
      // Predicated region
      $region13: #{cod_model_forward.1} parent=11 // pred_check
        %p286 = pneg %p77
      $region14: #{cod_model_forward.1} parent=11 // pred_check_branch
        %288 = sbr.rel (%p286) target = $region16
      $region15: #{cod_model_forward.1} parent=11 // pred_region
        _
      $region16: #{cod_model_forward.1} parent=11 // pred_fallthru
        _
      // Predicated region
      $region17: #{cod_model_forward.1} parent=11 // pred_check
        %p289 = pneg %p98
      $region18: #{cod_model_forward.1} parent=11 // pred_check_branch
        %291 = sbr.rel (%p289) target = $region20
      $region19: #{cod_model_forward.1} parent=11 // pred_region
        _
      $region20: #{cod_model_forward.1} parent=11 // pred_fallthru
        _
      // Predicated region
      $region21: #{cod_model_forward.1} parent=11 // pred_check
        %p292 = pneg %p119
      $region22: #{cod_model_forward.1} parent=11 // pred_check_branch
        %294 = sbr.rel (%p292) target = $region24
      $region23: #{cod_model_forward.1} parent=11 // pred_region
        _
      $region24: #{cod_model_forward.1} parent=11 // pred_fallthru
        _
      // Predicated region
      $region25: #{cod_model_forward.1} parent=11 // pred_check
        %p295 = pneg %p140
      $region26: #{cod_model_forward.1} parent=11 // pred_check_branch
        %297 = sbr.rel (%p295) target = $region28
      $region27: #{cod_model_forward.1} parent=11 // pred_region
        _
      $region28: #{cod_model_forward.1} parent=11 // pred_fallthru
        _
      // Predicated region
      $region29: #{cod_model_forward.1} parent=11 // pred_check
        %p298 = pneg %p161
      $region30: #{cod_model_forward.1} parent=11 // pred_check_branch
        %300 = sbr.rel (%p298) target = $region32
      $region31: #{cod_model_forward.1} parent=11 // pred_region
        _
      $region32: #{cod_model_forward.1} parent=11 // pred_fallthru
        _
      // Predicated region
      $region33: #{cod_model_forward.1} parent=11 // pred_check
        %p301 = pneg %p182
      $region34: #{cod_model_forward.1} parent=11 // pred_check_branch
        %303 = sbr.rel (%p301) target = $region36
      $region35: #{cod_model_forward.1} parent=11 // pred_region
        _
      $region36: #{cod_model_forward.1} parent=11 // pred_fallthru
        _
      // Predicated region
      $region37: #{cod_model_forward.1} parent=11 // pred_check
        %p304 = pneg %p203
      $region38: #{cod_model_forward.1} parent=11 // pred_check_branch
        %306 = sbr.rel (%p304) target = $region40
      $region39: #{cod_model_forward.1} parent=11 // pred_region
        _
      $region40: #{cod_model_forward.1} parent=11 // pred_fallthru
        _
      // Predicated region
      $region41: #{cod_model_forward.1} parent=11 // pred_check
        %p307 = pneg %p224
      $region42: #{cod_model_forward.1} parent=11 // pred_check_branch
        %309 = sbr.rel (%p307) target = $region44
      $region43: #{cod_model_forward.1} parent=11 // pred_region
        _
      $region44: #{cod_model_forward.1} parent=11 // pred_fallthru
        _
      // Predicated region
      $region45: #{cod_model_forward.1} parent=11 // pred_check
        %p310 = pneg %p245
      $region46: #{cod_model_forward.1} parent=11 // pred_check_branch
        %312 = sbr.rel (%p310) target = $region48
      $region47: #{cod_model_forward.1} parent=11 // pred_region
        _
      $region48: #{cod_model_forward.1} parent=11 // pred_fallthru
        _
    $region12: #{cod_model_forward.1} parent=5 // pred_fallthru
      _
    %p313 = scmp.lt.s32.totalorder %s16, 2
    // Predicated region
    $region49: #{cod_model_forward.1} parent=5 // pred_check
      %p314 = pneg %p313
    $region50: #{cod_model_forward.1} parent=5 // pred_check_branch
      %316 = sbr.rel (%p314) target = $region52
    $region51: #{cod_model_forward.1} parent=5 // pred_region
      // Predicated region
      $region53: #{cod_model_forward.1} parent=51 // pred_check
        %p317 = pneg %p50
      $region54: #{cod_model_forward.1} parent=51 // pred_check_branch
        %319 = sbr.rel (%p317) target = $region56
      $region55: #{cod_model_forward.1} parent=51 // pred_region
        %s320 = smul.u32 8, %s24
        %p321 = scmp.lt.s32.totalorder %s23, 1
        %s322 = scalar_select %p321, %s23, 1
        %p323 = scmp.lt.s32.totalorder %s320, 7
        %s324 = scalar_select %p323, %s320, 7
        %s325 = smul.addr %s322, 8
        %s326 = sadd.s32 %s324, %s325
        %s327 = smul.addr %s326, 4
        %s328 = scalar_lea.vmem %s0, %s327
        %s329 = smul.u32 8, %s24
      $region56: #{cod_model_forward.1} parent=51 // pred_fallthru
        _
    $region52: #{cod_model_forward.1} parent=5 // pred_fallthru
      _
    %p330 = scmp.le.s32.totalorder 1, %s16
    %p331 = scmp.lt.s32.totalorder %s16, 3
    %p332 = pnand %p330, %p331
    %p333 = pneg %p332
    // Predicated region
    $region57: #{cod_model_forward.1} parent=5 // pred_check
      _
    $region58: #{cod_model_forward.1} parent=5 // pred_check_branch
      %335 = sbr.rel (%p332) target = $region60
    $region59: #{cod_model_forward.1} parent=5 // pred_region
      %s336 = ssub.s32 %s16, 1
      %s337 = smul.u32 8, %s26
      %p338 = scmp.lt.s32.totalorder %s25, 1
      %s339 = scalar_select %p338, %s25, 1
      %p340 = scmp.lt.s32.totalorder %s337, 7
      %s341 = scalar_select %p340, %s337, 7
      %s342 = smul.addr %s339, 8
      %s343 = sadd.s32 %s341, %s342
      %s344 = smul.addr %s343, 4
      %s345 = scalar_lea.vmem %s0, %s344
      %p346 = pneg %p56
      %p347 = pneg %p53
      %p348 = pneg %p77
      %p349 = pneg %p74
      %p350 = pneg %p98
      %p351 = pneg %p95
      %p352 = pneg %p119
      %p353 = pneg %p116
      %p354 = pneg %p140
      %p355 = pneg %p137
      %p356 = pneg %p161
      %p357 = pneg %p158
      %p358 = pneg %p182
      %p359 = pneg %p179
      %p360 = pneg %p203
      %p361 = pneg %p200
      %p362 = pneg %p224
      %p363 = pneg %p221
      %p364 = pneg %p245
      %p365 = pneg %p242
      %p366 = pneg %p271
      %p367 = pneg %p268
      %p368 = scmp.lt.s32.totalorder %s25, 1
      %s369 = scalar_select %p368, %s25, 1
      %s370 = scalar_lea.vmem %s10, %s369
      %s371 = smul.u32 8, %s26
      %p372 = scmp.lt.s32.totalorder %s25, 1
      %s373 = scalar_select %p372, %s25, 1
      %p374 = scmp.lt.s32.totalorder %s371, 7
      %s375 = scalar_select %p374, %s371, 7
      %s376 = smul.addr %s373, 8
      %s377 = sadd.s32 %s375, %s376
      %s378 = smul.addr %s377, 4
      %s379 = scalar_lea.vmem %s0, %s378
      %s380 = smul.u32 8, %s26
      %p381 = scmp.lt.s32.totalorder %s25, 1
      %s382 = scalar_select %p381, %s25, 1
      %s383 = scalar_lea.vmem %s10, %s382
      %p384 = scmp.eq.s32.totalorder %s26, 0
      // Predicated region
      $region61: #{cod_model_forward.1} parent=59 // pred_check
        %p385 = pneg %p384
      $region62: #{cod_model_forward.1} parent=59 // pred_check_branch
        %387 = sbr.rel (%p385) target = $region64
      $region63: #{cod_model_forward.1} parent=59 // pred_region
        %388 = vst [vmem:[#allocation2] sm:$0xff] 0.0
      $region64: #{cod_model_forward.1} parent=59 // pred_fallthru
        _
      %v389 = vld [vmem:[%s379] sm:$0xf]
      %v390 = vld [vmem:[%s379 + $0x4] sm:$0xf]
      %v391 = vld [vmem:[%s379 + $0x8] sm:$0xf]
      %v392 = vld [vmem:[%s379 + $0xc] sm:$0xf]
      %v393 = vld [vmem:[%s379 + $0x10] sm:$0xf]
      %v394 = vld [vmem:[%s379 + $0x14] sm:$0xf]
      %v395 = vld [vmem:[%s379 + $0x18] sm:$0xf]
      %v396 = vld [vmem:[%s379 + $0x1c] sm:$0xf]
      %v397 = vld [vmem:[%s1] sm:$0xf]
      %v398 = vld [vmem:[%s1 + $0x4] sm:$0xf]
      %v399 = vld [vmem:[%s1 + $0x8] sm:$0xf]
      %v400 = vld [vmem:[%s1 + $0xc] sm:$0xf]
      %v401 = vld [vmem:[%s1 + $0x10] sm:$0xf]
      %v402 = vld [vmem:[%s1 + $0x14] sm:$0xf]
      %v403 = vld [vmem:[%s1 + $0x18] sm:$0xf]
      %v404 = vld [vmem:[%s1 + $0x1c] sm:$0xf]
      %v405 = vld [vmem:[%s1 + $0x20] sm:$0xf]
      %v406 = vld [vmem:[%s1 + $0x24] sm:$0xf]
      %v407 = vld [vmem:[%s1 + $0x28] sm:$0xf]
      %v408 = vld [vmem:[%s1 + $0x2c] sm:$0xf]
      %v409 = vld [vmem:[%s1 + $0x30] sm:$0xf]
      %v410 = vld [vmem:[%s1 + $0x34] sm:$0xf]
      %v411 = vld [vmem:[%s1 + $0x38] sm:$0xf]
      %v412 = vld [vmem:[%s1 + $0x3c] sm:$0xf]
      %v413 = vld [vmem:[%s2] sm:$0x1]
      %v415 = vperm.slane %v413, 0
      %v425 = vunpack.c.l.b16 %v389
      %v426 = vunpack.c.l.b16 %v390
      %v427 = vunpack.c.l.b16 %v391
      %v428 = vunpack.c.l.b16 %v392
      %v429 = vunpack.c.l.b16 %v393
      %v430 = vunpack.c.l.b16 %v394
      %v431 = vunpack.c.l.b16 %v395
      %v432 = vunpack.c.l.b16 %v396
      %v433 = vpack.c.b16 %v426, %v425
      %v434 = vpack.c.b16 %v428, %v427
      %v435 = vpack.c.b16 %v430, %v429
      %v436 = vpack.c.b16 %v432, %v431
      %v457 = vunpack.c.l.b16 %v397
      %v458 = vunpack.c.l.b16 %v398
      %v459 = vunpack.c.l.b16 %v399
      %v460 = vunpack.c.l.b16 %v400
      %v461 = vunpack.c.l.b16 %v401
      %v462 = vunpack.c.l.b16 %v402
      %v463 = vunpack.c.l.b16 %v403
      %v464 = vunpack.c.l.b16 %v404
      %v465 = vunpack.c.l.b16 %v405
      %v466 = vunpack.c.l.b16 %v406
      %v467 = vunpack.c.l.b16 %v407
      %v468 = vunpack.c.l.b16 %v408
      %v469 = vunpack.c.l.b16 %v409
      %v470 = vunpack.c.l.b16 %v410
      %v471 = vunpack.c.l.b16 %v411
      %v472 = vunpack.c.l.b16 %v412
      %v473 = vpack.c.b16 %v458, %v457
      %v474 = vpack.c.b16 %v460, %v459
      %v475 = vpack.c.b16 %v462, %v461
      %v476 = vpack.c.b16 %v464, %v463
      %v477 = vpack.c.b16 %v466, %v465
      %v478 = vpack.c.b16 %v468, %v467
      %v479 = vpack.c.b16 %v470, %v469
      %v480 = vpack.c.b16 %v472, %v471
      %489 = vmatpush.bf16.msra.mxu0 %v480
      %490 = vmatpush.bf16.msra.mxu0 %v479
      %491 = vmatpush.bf16.msra.mxu0 %v478
      %492 = vmatpush.bf16.msra.mxu0 %v477
      %493 = vmatpush.bf16.msra.mxu0 %v476
      %494 = vmatpush.bf16.msra.mxu0 %v475
      %495 = vmatpush.bf16.msra.mxu0 %v474
      %496 = vmatpush.bf16.msra.mxu0 %v473
      %497 = vmatmul.bf16.gmra.mxu0 %v433
      %v498 = vpop.f32.mrf.mxu0
      %v499 = vadd.f32 %v415, %v498
      %v500 = vpop.f32.mrf.mxu0
      %v501 = vadd.f32 %v415, %v500
      %502 = vmatmul.bf16.gmra.mxu0 %v434
      %v503 = vpop.f32.mrf.mxu0
      %v504 = vadd.f32 %v415, %v503
      %v505 = vpop.f32.mrf.mxu0
      %v506 = vadd.f32 %v415, %v505
      %507 = vmatmul.bf16.gmra.mxu0 %v435
      %v508 = vpop.f32.mrf.mxu0
      %v509 = vadd.f32 %v415, %v508
      %v510 = vpop.f32.mrf.mxu0
      %v511 = vadd.f32 %v415, %v510
      %512 = vmatmul.bf16.gmra.mxu0 %v436
      %v513 = vpop.f32.mrf.mxu0
      %v514 = vadd.f32 %v415, %v513
      %v515 = vpop.f32.mrf.mxu0
      %v516 = vadd.f32 %v415, %v515
      %517 = vdwg.mxu0
      %v518 = vxor.u32 %v499, 2147483648
      %v519 = vxor.u32 %v501, 2147483648
      %v520 = vxor.u32 %v504, 2147483648
      %v521 = vxor.u32 %v506, 2147483648
      %v522 = vxor.u32 %v509, 2147483648
      %v523 = vxor.u32 %v511, 2147483648
      %v524 = vxor.u32 %v514, 2147483648
      %v525 = vxor.u32 %v516, 2147483648
      %v526 = vmul.f32 %v518, 1.442695
      %v527 = vpow.pop %v526
      %v528 = vmul.f32 %v519, 1.442695
      %v529 = vpow.pop %v528
      %v530 = vmul.f32 %v520, 1.442695
      %v531 = vpow.pop %v530
      %v532 = vmul.f32 %v521, 1.442695
      %v533 = vpow.pop %v532
      %v534 = vmul.f32 %v522, 1.442695
      %v535 = vpow.pop %v534
      %v536 = vmul.f32 %v523, 1.442695
      %v537 = vpow.pop %v536
      %v538 = vmul.f32 %v524, 1.442695
      %v539 = vpow.pop %v538
      %v540 = vmul.f32 %v525, 1.442695
      %v541 = vpow.pop %v540
      %v542 = vadd.f32 %v527, 1.0
      %v543 = vadd.f32 %v529, 1.0
      %v544 = vadd.f32 %v531, 1.0
      %v545 = vadd.f32 %v533, 1.0
      %v546 = vadd.f32 %v535, 1.0
      %v547 = vadd.f32 %v537, 1.0
      %v548 = vadd.f32 %v539, 1.0
      %v549 = vadd.f32 %v541, 1.0
      %v550 = vrcp.pop %v542
      %v551 = vmul.f32 %v542, %v550
      %v552 = vsub.f32 1.0, %v551
      %v553 = vmul.f32 %v550, %v552
      %v554 = vadd.f32 %v550, %v553
      %vm555 = vweird.f32 %v542
      %vm556 = vweird.f32 %v550
      %vm557 = vmor %vm555, %vm556
      %v558 = vsel %vm557, %v550, %v554
      %v559 = vand.u32 2147483647, %v542
      %vm560 = vcmp.eq.f32.partialorder %v559, 8.507059e+37
      %v561 = vand.u32 %v542, 2147483648
      %v562 = vor.u32 1.1754944e-38, %v561
      %v563 = vsel %vm560, %v562, %v558
      %v564 = vmul.f32 1.0, %v563
      %v565 = vrcp.pop %v543
      %v566 = vmul.f32 %v543, %v565
      %v567 = vsub.f32 1.0, %v566
      %v568 = vmul.f32 %v565, %v567
      %v569 = vadd.f32 %v565, %v568
      %vm570 = vweird.f32 %v543
      %vm571 = vweird.f32 %v565
      %vm572 = vmor %vm570, %vm571
      %v573 = vsel %vm572, %v565, %v569
      %v574 = vand.u32 2147483647, %v543
      %vm575 = vcmp.eq.f32.partialorder %v574, 8.507059e+37
      %v576 = vand.u32 %v543, 2147483648
      %v577 = vor.u32 1.1754944e-38, %v576
      %v578 = vsel %vm575, %v577, %v573
      %v579 = vmul.f32 1.0, %v578
      %v580 = vrcp.pop %v544
      %v581 = vmul.f32 %v544, %v580
      %v582 = vsub.f32 1.0, %v581
      %v583 = vmul.f32 %v580, %v582
      %v584 = vadd.f32 %v580, %v583
      %vm585 = vweird.f32 %v544
      %vm586 = vweird.f32 %v580
      %vm587 = vmor %vm585, %vm586
      %v588 = vsel %vm587, %v580, %v584
      %v589 = vand.u32 2147483647, %v544
      %vm590 = vcmp.eq.f32.partialorder %v589, 8.507059e+37
      %v591 = vand.u32 %v544, 2147483648
      %v592 = vor.u32 1.1754944e-38, %v591
      %v593 = vsel %vm590, %v592, %v588
      %v594 = vmul.f32 1.0, %v593
      %v595 = vrcp.pop %v545
      %v596 = vmul.f32 %v545, %v595
      %v597 = vsub.f32 1.0, %v596
      %v598 = vmul.f32 %v595, %v597
      %v599 = vadd.f32 %v595, %v598
      %vm600 = vweird.f32 %v545
      %vm601 = vweird.f32 %v595
      %vm602 = vmor %vm600, %vm601
      %v603 = vsel %vm602, %v595, %v599
      %v604 = vand.u32 2147483647, %v545
      %vm605 = vcmp.eq.f32.partialorder %v604, 8.507059e+37
      %v606 = vand.u32 %v545, 2147483648
      %v607 = vor.u32 1.1754944e-38, %v606
      %v608 = vsel %vm605, %v607, %v603
      %v609 = vmul.f32 1.0, %v608
      %v610 = vrcp.pop %v546
      %v611 = vmul.f32 %v546, %v610
      %v612 = vsub.f32 1.0, %v611
      %v613 = vmul.f32 %v610, %v612
      %v614 = vadd.f32 %v610, %v613
      %vm615 = vweird.f32 %v546
      %vm616 = vweird.f32 %v610
      %vm617 = vmor %vm615, %vm616
      %v618 = vsel %vm617, %v610, %v614
      %v619 = vand.u32 2147483647, %v546
      %vm620 = vcmp.eq.f32.partialorder %v619, 8.507059e+37
      %v621 = vand.u32 %v546, 2147483648
      %v622 = vor.u32 1.1754944e-38, %v621
      %v623 = vsel %vm620, %v622, %v618
      %v624 = vmul.f32 1.0, %v623
      %v625 = vrcp.pop %v547
      %v626 = vmul.f32 %v547, %v625
      %v627 = vsub.f32 1.0, %v626
      %v628 = vmul.f32 %v625, %v627
      %v629 = vadd.f32 %v625, %v628
      %vm630 = vweird.f32 %v547
      %vm631 = vweird.f32 %v625
      %vm632 = vmor %vm630, %vm631
      %v633 = vsel %vm632, %v625, %v629
      %v634 = vand.u32 2147483647, %v547
      %vm635 = vcmp.eq.f32.partialorder %v634, 8.507059e+37
      %v636 = vand.u32 %v547, 2147483648
      %v637 = vor.u32 1.1754944e-38, %v636
      %v638 = vsel %vm635, %v637, %v633
      %v639 = vmul.f32 1.0, %v638
      %v640 = vrcp.pop %v548
      %v641 = vmul.f32 %v548, %v640
      %v642 = vsub.f32 1.0, %v641
      %v643 = vmul.f32 %v640, %v642
      %v644 = vadd.f32 %v640, %v643
      %vm645 = vweird.f32 %v548
      %vm646 = vweird.f32 %v640
      %vm647 = vmor %vm645, %vm646
      %v648 = vsel %vm647, %v640, %v644
      %v649 = vand.u32 2147483647, %v548
      %vm650 = vcmp.eq.f32.partialorder %v649, 8.507059e+37
      %v651 = vand.u32 %v548, 2147483648
      %v652 = vor.u32 1.1754944e-38, %v651
      %v653 = vsel %vm650, %v652, %v648
      %v654 = vmul.f32 1.0, %v653
      %v655 = vrcp.pop %v549
      %v656 = vmul.f32 %v549, %v655
      %v657 = vsub.f32 1.0, %v656
      %v658 = vmul.f32 %v655, %v657
      %v659 = vadd.f32 %v655, %v658
      %vm660 = vweird.f32 %v549
      %vm661 = vweird.f32 %v655
      %vm662 = vmor %vm660, %vm661
      %v663 = vsel %vm662, %v655, %v659
      %v664 = vand.u32 2147483647, %v549
      %vm665 = vcmp.eq.f32.partialorder %v664, 8.507059e+37
      %v666 = vand.u32 %v549, 2147483648
      %v667 = vor.u32 1.1754944e-38, %v666
      %v668 = vsel %vm665, %v667, %v663
      %v669 = vmul.f32 1.0, %v668
      %v670 = vmul.f32 %v499, %v564
      %v671 = vmul.f32 %v501, %v579
      %v672 = vmul.f32 %v504, %v594
      %v673 = vmul.f32 %v506, %v609
      %v674 = vmul.f32 %v509, %v624
      %v675 = vmul.f32 %v511, %v639
      %v676 = vmul.f32 %v514, %v654
      %v677 = vmul.f32 %v516, %v669
      %v678 = vld [vmem:[#allocation2] sm:$0xff]
      %v679 = vadd.f32 %v670, %v671
      %v680 = vadd.f32 %v679, %v672
      %v681 = vadd.f32 %v680, %v673
      %v682 = vadd.f32 %v681, %v674
      %v683 = vadd.f32 %v682, %v675
      %v684 = vadd.f32 %v683, %v676
      %v685 = vadd.f32 %v684, %v677
      %v686 = vadd.f32 %v678, %v685
      %687 = vst [vmem:[#allocation2] sm:$0xff] %v686
      // Predicated region
      $region65: #{cod_model_forward.1} parent=59 // pred_check
        %p688 = pneg %p384
      $region66: #{cod_model_forward.1} parent=59 // pred_check_branch
        %690 = sbr.rel (%p688) target = $region68
      $region67: #{cod_model_forward.1} parent=59 // pred_region
        %v691 = vld [vmem:[#allocation2] sm:$0xff]
        %v692 = vrot.slane %v691, 4
        %v693 = vadd.f32 %v691, %v692
        %v694 = vrot.slane %v693, 2
        %v695 = vadd.f32 %v693, %v694
        %v696 = vrot.slane %v695, 1
        %v697 = vadd.f32 %v695, %v696
        %v698 = vld [vmem:[%s3] sm:$0x1]
        %v699 = vsub.f32 %v697, %v698
        %v700 = vmul.f32 %v699, 0.015625
        %v701 = vld [vmem:[%s4] sm:$0xff]
        %v702 = vld [vmem:[%s4 + $0x8] sm:$0xff]
        %v703 = vld [vmem:[%s4 + $0x10] sm:$0xff]
        %v704 = vld [vmem:[%s4 + $0x18] sm:$0xff]
        %v705 = vld [vmem:[%s4 + $0x20] sm:$0xff]
        %v706 = vld [vmem:[%s4 + $0x28] sm:$0xff]
        %v707 = vld [vmem:[%s4 + $0x30] sm:$0xff]
        %v708 = vld [vmem:[%s4 + $0x38] sm:$0xff]
        %v709 = vld [vmem:[%s4 + $0x40] sm:$0xff]
        %v710 = vld [vmem:[%s4 + $0x48] sm:$0xff]
        %v711 = vld [vmem:[%s4 + $0x50] sm:$0xff]
        %v712 = vld [vmem:[%s4 + $0x58] sm:$0xff]
        %v713 = vld [vmem:[%s4 + $0x60] sm:$0xff]
        %v714 = vld [vmem:[%s4 + $0x68] sm:$0xff]
        %v715 = vld [vmem:[%s4 + $0x70] sm:$0xff]
        %v716 = vld [vmem:[%s4 + $0x78] sm:$0xff]
        %v717 = vld [vmem:[%s4 + $0x80] sm:$0xff]
        %v718 = vld [vmem:[%s4 + $0x88] sm:$0xff]
        %v719 = vld [vmem:[%s4 + $0x90] sm:$0xff]
        %v720 = vld [vmem:[%s4 + $0x98] sm:$0xff]
        %v721 = vld [vmem:[%s4 + $0xa0] sm:$0xff]
        %v722 = vld [vmem:[%s4 + $0xa8] sm:$0xff]
        %v723 = vld [vmem:[%s4 + $0xb0] sm:$0xff]
        %v724 = vld [vmem:[%s4 + $0xb8] sm:$0xff]
        %v725 = vld [vmem:[%s4 + $0xc0] sm:$0xff]
        %v726 = vld [vmem:[%s4 + $0xc8] sm:$0xff]
        %v727 = vld [vmem:[%s4 + $0xd0] sm:$0xff]
        %v728 = vld [vmem:[%s4 + $0xd8] sm:$0xff]
        %v729 = vld [vmem:[%s4 + $0xe0] sm:$0xff]
        %v730 = vld [vmem:[%s4 + $0xe8] sm:$0xff]
        %v731 = vld [vmem:[%s4 + $0xf0] sm:$0xff]
        %v732 = vld [vmem:[%s4 + $0xf8] sm:$0xff]
        %v733 = vld [vmem:[%s5] sm:$0x3]
        %v735 = vperm.slane %v733, 0
        %v736 = vperm.slane %v733, 1
        %739 = vmatpush.msra.mxu0 %v731
        %740 = vmatpush.msra.mxu0 %v729
        %741 = vmatpush.msra.mxu0 %v727
        %742 = vmatpush.msra.mxu0 %v725
        %743 = vmatpush.msra.mxu0 %v723
        %744 = vmatpush.msra.mxu0 %v721
        %745 = vmatpush.msra.mxu0 %v719
        %746 = vmatpush.msra.mxu0 %v717
        %747 = vmatpush.msra.mxu0 %v715
        %748 = vmatpush.msra.mxu0 %v713
        %749 = vmatpush.msra.mxu0 %v711
        %750 = vmatpush.msra.mxu0 %v709
        %751 = vmatpush.msra.mxu0 %v707
        %752 = vmatpush.msra.mxu0 %v705
        %753 = vmatpush.msra.mxu0 %v703
        %754 = vmatpush.msra.mxu0 %v701
        %755 = vmatmul.f32.gmra.mxu0 %v700
        %v756 = vpop.f32.mrf.mxu0
        %v757 = vadd.f32 %v735, %v756
        %758 = vdwg.mxu0
        %759 = vmatpush.msra.mxu0 %v732
        %760 = vmatpush.msra.mxu0 %v730
        %761 = vmatpush.msra.mxu0 %v728
        %762 = vmatpush.msra.mxu0 %v726
        %763 = vmatpush.msra.mxu0 %v724
        %764 = vmatpush.msra.mxu0 %v722
        %765 = vmatpush.msra.mxu0 %v720
        %766 = vmatpush.msra.mxu0 %v718
        %767 = vmatpush.msra.mxu0 %v716
        %768 = vmatpush.msra.mxu0 %v714
        %769 = vmatpush.msra.mxu0 %v712
        %770 = vmatpush.msra.mxu0 %v710
        %771 = vmatpush.msra.mxu0 %v708
        %772 = vmatpush.msra.mxu0 %v706
        %773 = vmatpush.msra.mxu0 %v704
        %774 = vmatpush.msra.mxu0 %v702
        %775 = vmatmul.f32.gmra.mxu0 %v700
        %v776 = vpop.f32.mrf.mxu0
        %v777 = vadd.f32 %v736, %v776
        %778 = vdwg.mxu0
        %vm779 = vcmp.gt.f32.partialorder %v757, 0.0
        %vm780 = vcmp.gt.f32.partialorder %v777, 0.0
        %v781 = vmul.f32 %v757, 0.01
        %v782 = vmul.f32 %v777, 0.01
        %v783 = vsel %vm779, %v757, %v781
        %v784 = vsel %vm780, %v777, %v782
        %v785 = vld [vmem:[%s6] sm:$0xff]
        %v786 = vld [vmem:[%s6 + $0x8] sm:$0xff]
        %v787 = vld [vmem:[%s6 + $0x10] sm:$0xff]
        %v788 = vld [vmem:[%s6 + $0x18] sm:$0xff]
        %v789 = vld [vmem:[%s6 + $0x20] sm:$0xff]
        %v790 = vld [vmem:[%s6 + $0x28] sm:$0xff]
        %v791 = vld [vmem:[%s6 + $0x30] sm:$0xff]
        %v792 = vld [vmem:[%s6 + $0x38] sm:$0xff]
        %v793 = vld [vmem:[%s6 + $0x40] sm:$0xff]
        %v794 = vld [vmem:[%s6 + $0x48] sm:$0xff]
        %v795 = vld [vmem:[%s6 + $0x50] sm:$0xff]
        %v796 = vld [vmem:[%s6 + $0x58] sm:$0xff]
        %v797 = vld [vmem:[%s6 + $0x60] sm:$0xff]
        %v798 = vld [vmem:[%s6 + $0x68] sm:$0xff]
        %v799 = vld [vmem:[%s6 + $0x70] sm:$0xff]
        %v800 = vld [vmem:[%s6 + $0x78] sm:$0xff]
        %v801 = vld [vmem:[%s6 + $0x80] sm:$0xff]
        %v802 = vld [vmem:[%s6 + $0x88] sm:$0xff]
        %v803 = vld [vmem:[%s6 + $0x90] sm:$0xff]
        %v804 = vld [vmem:[%s6 + $0x98] sm:$0xff]
        %v805 = vld [vmem:[%s6 + $0xa0] sm:$0xff]
        %v806 = vld [vmem:[%s6 + $0xa8] sm:$0xff]
        %v807 = vld [vmem:[%s6 + $0xb0] sm:$0xff]
        %v808 = vld [vmem:[%s6 + $0xb8] sm:$0xff]
        %v809 = vld [vmem:[%s6 + $0xc0] sm:$0xff]
        %v810 = vld [vmem:[%s6 + $0xc8] sm:$0xff]
        %v811 = vld [vmem:[%s6 + $0xd0] sm:$0xff]
        %v812 = vld [vmem:[%s6 + $0xd8] sm:$0xff]
        %v813 = vld [vmem:[%s6 + $0xe0] sm:$0xff]
        %v814 = vld [vmem:[%s6 + $0xe8] sm:$0xff]
        %v815 = vld [vmem:[%s6 + $0xf0] sm:$0xff]
        %v816 = vld [vmem:[%s6 + $0xf8] sm:$0xff]
        %v817 = vld [vmem:[%s7] sm:$0x1]
        %818 = vmatpush.msra.mxu0 %v800
        %819 = vmatpush.msra.mxu0 %v799
        %820 = vmatpush.msra.mxu0 %v798
        %821 = vmatpush.msra.mxu0 %v797
        %822 = vmatpush.msra.mxu0 %v796
        %823 = vmatpush.msra.mxu0 %v795
        %824 = vmatpush.msra.mxu0 %v794
        %825 = vmatpush.msra.mxu0 %v793
        %826 = vmatpush.msra.mxu0 %v792
        %827 = vmatpush.msra.mxu0 %v791
        %828 = vmatpush.msra.mxu0 %v790
        %829 = vmatpush.msra.mxu0 %v789
        %830 = vmatpush.msra.mxu0 %v788
        %831 = vmatpush.msra.mxu0 %v787
        %832 = vmatpush.msra.mxu0 %v786
        %833 = vmatpush.msra.mxu0 %v785
        %834 = vmatmul.f32.gmra.mxu0 %v783
        %v835 = vpop.f32.mrf.mxu0
        %v836 = vadd.f32 %v817, %v835
        %837 = vdwg.mxu0
        %838 = vmatpush.msra.mxu0 %v816
        %839 = vmatpush.msra.mxu0 %v815
        %840 = vmatpush.msra.mxu0 %v814
        %841 = vmatpush.msra.mxu0 %v813
        %842 = vmatpush.msra.mxu0 %v812
        %843 = vmatpush.msra.mxu0 %v811
        %844 = vmatpush.msra.mxu0 %v810
        %845 = vmatpush.msra.mxu0 %v809
        %846 = vmatpush.msra.mxu0 %v808
        %847 = vmatpush.msra.mxu0 %v807
        %848 = vmatpush.msra.mxu0 %v806
        %849 = vmatpush.msra.mxu0 %v805
        %850 = vmatpush.msra.mxu0 %v804
        %851 = vmatpush.msra.mxu0 %v803
        %852 = vmatpush.msra.mxu0 %v802
        %853 = vmatpush.msra.mxu0 %v801
        %854 = vmatmul.f32.gmra.mxu0 %v784
        %v855 = vpop.f32.mrf.mxu0
        %v856 = vadd.f32 %v836, %v855
        %857 = vdwg.mxu0
        %vm858 = vcmp.gt.f32.partialorder %v856, 0.0
        %v859 = vmul.f32 %v856, 0.01
        %v860 = vsel %vm858, %v856, %v859
        %v861 = vld [vmem:[%s8] sm:$0xff]
        %v862 = vld [vmem:[%s8 + $0x8] sm:$0xff]
        %v863 = vld [vmem:[%s8 + $0x10] sm:$0xff]
        %v864 = vld [vmem:[%s8 + $0x18] sm:$0xff]
        %v865 = vld [vmem:[%s9] sm:$0x1]
        %vm866 = vcmask 261120
        %v868 = vsel %vm866, %v860, 0
        %870 = vmatpush.msra.mxu0 0.0
        %871 = vmatpush.msra.mxu0 0.0
        %872 = vmatpush.msra.mxu0 0.0
        %873 = vmatpush.msra.mxu0 0.0
        %874 = vmatpush.msra.mxu0 0.0
        %875 = vmatpush.msra.mxu0 0.0
        %876 = vmatpush.msra.mxu0 0.0
        %877 = vmatpush.msra.mxu0 0.0
        %878 = vmatpush.msra.mxu0 0.0
        %879 = vmatpush.msra.mxu0 0.0
        %880 = vmatpush.msra.mxu0 0.0
        %881 = vmatpush.msra.mxu0 0.0
        %882 = vmatpush.msra.mxu0 %v864
        %883 = vmatpush.msra.mxu0 %v863
        %884 = vmatpush.msra.mxu0 %v862
        %885 = vmatpush.msra.mxu0 %v861
        %886 = vmatmul.f32.gmra.mxu0 %v868
        %v887 = vpop.f32.mrf.mxu0
        %v888 = vadd.f32 %v865, %v887
        %889 = vdwg.mxu0
        %890 = vst [vmem:[%s383] sm:$0x1] %v888
      $region68: #{cod_model_forward.1} parent=59 // pred_fallthru
        _
      %p891 = scmp.lt.s32.totalorder %s25, 1
      %s892 = scalar_select %p891, %s25, 1
      %s893 = scalar_lea.vmem %s10, %s892
      // Predicated region
      $region69: #{cod_model_forward.1} parent=59 // pred_check
        %p894 = pneg %p268
      $region70: #{cod_model_forward.1} parent=59 // pred_check_branch
        %896 = sbr.rel (%p894) target = $region72
      $region71: #{cod_model_forward.1} parent=59 // pred_region
        _
      $region72: #{cod_model_forward.1} parent=59 // pred_fallthru
        _
    $region60: #{cod_model_forward.1} parent=5 // pred_fallthru
      _
    %p897 = scmp.le.s32.totalorder 2, %s16
    // Predicated region
    $region73: #{cod_model_forward.1} parent=5 // pred_check
      %p898 = pneg %p897
    $region74: #{cod_model_forward.1} parent=5 // pred_check_branch
      %900 = sbr.rel (%p898) target = $region76
    $region75: #{cod_model_forward.1} parent=5 // pred_region
      %s901 = ssub.s32 %s16, 2
      // Predicated region
      $region77: #{cod_model_forward.1} parent=75 // pred_check
        %p902 = pneg %p274
      $region78: #{cod_model_forward.1} parent=75 // pred_check_branch
        %904 = sbr.rel (%p902) target = $region80
      $region79: #{cod_model_forward.1} parent=75 // pred_region
        %p905 = scmp.lt.s32.totalorder %s27, 1
        %s906 = scalar_select %p905, %s27, 1
        %s907 = scalar_lea.vmem %s10, %s906
      $region80: #{cod_model_forward.1} parent=75 // pred_fallthru
        _
    $region76: #{cod_model_forward.1} parent=5 // pred_fallthru
      _
  $region6: #{cod_model_forward.1} parent=0 // loop_footer
    %s20 = sadd.s32 1, %s16
  $region7: #{cod_model_forward.1} parent=0 // loop_footer_branch
    %15 = sbr.rel target = $region3
  $region8: #{cod_model_forward.1} parent=0 // loop_exit
    _

</llo_original>
